<compile_context>
chip_gen: v5e
topology: v5e:2x2
jax: 0.10.0
libtpu: 0.0.40
codegen_flags: <defaults>
</compile_context>

<pallas_src>
import jax
import jax.numpy as jnp
from jax.experimental import pallas as pl
from jax.experimental.pallas import tpu as pltpu


def _identity_copy_kernel(x_ref, o_ref):
    # Pure pass-through: load the tile and store it unchanged.
    o_ref[...] = x_ref[...]


def _sublane_packing(dtype) -> int:
    # Rows of one packed vreg tile: 8 for 4-byte, 16 for 2-byte, 32 for 1-byte.
    itemsize = jnp.dtype(dtype).itemsize
    return {4: 8, 2: 16, 1: 32}.get(itemsize, 8)


def _vmem_capacity_bytes() -> int:
    # Generation-aware VMEM query; conservative 64 MiB (v7x per-TC) fallback.
    try:
        return int(pltpu.get_tpu_info().vmem_capacity_bytes)
    except Exception:
        return 64 * 1024 * 1024


def identity(x: jax.Array) -> jax.Array:
    """nn.Identity.forward — the optimal implementation is no kernel at all."""
    return x


def identity_pallas(x: jax.Array, *, target_block_bytes: int | None = None) -> jax.Array:
    """Identity through an explicit Pallas kernel boundary (bit-exact copy).

    Only for callers that *require* a pallas_call; otherwise use `identity`.
    Ragged / tiny tensors fall back to returning x (exact nn.Identity, zero
    cost) rather than paying for a padded copy.
    """
    dtype = x.dtype
    itemsize = jnp.dtype(dtype).itemsize
    packing = _sublane_packing(dtype)
    n = x.size

    min_tile_elems = packing * 128
    if n == 0 or n % min_tile_elems != 0:
        return x

    # --- Generation-aware block / VMEM budgeting ----------------------------
    capacity = _vmem_capacity_bytes()
    if target_block_bytes is None:
        # v5e/v6e (128 MiB VMEM): big blocks amortize the ~0.35 us/step cost.
        # v7x (64 MiB VMEM): keep 4 MiB blocks so 4x block stays well inside.
        target_block_bytes = (12 * 1024 * 1024 if capacity >= 100 * 1024 * 1024
                              else 4 * 1024 * 1024)
    scoped_cap = max(32 * 1024 * 1024, capacity * 3 // 4)
    # in + out, double-buffered = 4x block, plus slack; shrink block to fit.
    max_block_bytes = min(target_block_bytes, (scoped_cap - (2 << 20)) // 4)

    # --- Lane-dense slab: pure contiguous reshape, no data movement ---------
    lanes = 128
    while (lanes < 8192
           and n % (lanes * 2) == 0
           and (n // (lanes * 2)) % packing == 0):
        lanes *= 2
    rows = n // lanes                      # always a multiple of `packing`
    slab = x.reshape(rows, lanes)

    # --- Fixed multi-MiB row tile + cdiv grid (no degenerate divisor search)
    row_bytes = lanes * itemsize
    tr = max(packing, (max_block_bytes // row_bytes) // packing * packing)
    tr = min(tr, rows)
    grid = (pl.cdiv(rows, tr),)

    block_bytes = tr * lanes * itemsize
    vmem_limit = int(min(scoped_cap,
                         max(16 * 1024 * 1024, 4 * block_bytes + (2 << 20))))

    out = pl.pallas_call(
        _identity_copy_kernel,
        out_shape=jax.ShapeDtypeStruct((rows, lanes), dtype),
        grid_spec=pltpu.PrefetchScalarGridSpec(
            num_scalar_prefetch=0,
            grid=grid,
            in_specs=[pl.BlockSpec((tr, lanes), lambda i: (i, 0))],
            out_specs=pl.BlockSpec((tr, lanes), lambda i: (i, 0)),
        ),
        cost_estimate=pl.CostEstimate(
            flops=0, transcendentals=0, bytes_accessed=2 * n * itemsize),
        compiler_params=pltpu.CompilerParams(
            dimension_semantics=("parallel",),
            vmem_limit_bytes=vmem_limit,
        ),
    )(slab)

    return out.reshape(x.shape)


if __name__ == "__main__":
    key = jax.random.PRNGKey(0)

    x = jax.random.normal(key, (2, 4, 16, 16), dtype=jnp.float32)

    # Optimal Identity forward: return x directly (no HBM traffic, no launch).
    y = identity(x)
    assert y is x

    # Explicit Pallas kernel boundary, for callers that require one.
    y_k = identity_pallas(x)
    jax.block_until_ready(y_k)
    assert y_k.shape == x.shape, (y_k.shape, x.shape)
    assert y_k.dtype == x.dtype, (y_k.dtype, x.dtype)
    assert bool(jnp.all(y_k == x)), "identity kernel output mismatch"

    # Ragged case: falls back to returning x (exact Identity, zero cost).
    x2 = jax.random.normal(key, (3, 5, 7), dtype=jnp.float32)
    y2 = identity_pallas(x2)
    jax.block_until_ready(y2)
    assert y2.shape == x2.shape and bool(jnp.all(y2 == x2))

    print("KERNEL_OK")
</pallas_src>

<mosaic_0001>
module attributes {stable_mosaic.version = 11 : i64} {
  func.func @_identity_copy_kernel(%arg0: i32, %arg1: memref<8x256xf32, #tpu.memory_space<vmem>>, %arg2: memref<8x256xf32, #tpu.memory_space<vmem>>) attributes {dimension_semantics = [#tpu.dimension_semantics<parallel>], iteration_bounds = array<i64: 1>, scalar_prefetch = 0 : i64, scratch_operands = 0 : i64, tpu.core_type = #tpu.core_type<tc>, window_params = [{transform_indices = @transform_0, window_bounds = array<i64: 8, 256>}, {transform_indices = @transform_1, window_bounds = array<i64: 8, 256>}]} {
    %c0 = arith.constant 0 : index
    %c0_0 = arith.constant 0 : index
    %0 = vector.load %arg1[%c0, %c0_0] : memref<8x256xf32, #tpu.memory_space<vmem>>, vector<8x256xf32>
    %c0_1 = arith.constant 0 : index
    %c0_2 = arith.constant 0 : index
    %1 = vector.load %arg2[%c0_1, %c0_2] : memref<8x256xf32, #tpu.memory_space<vmem>>, vector<8x256xf32>
    tpu.vector_store %arg2[%c0_1, %c0_2], %0 {strides = array<i32>} : memref<8x256xf32, #tpu.memory_space<vmem>>, vector<8x256xf32>,
    return
  }
  func.func @transform_0(%arg0: i32) -> (i32, i32) {
    %c0_i32 = arith.constant 0 : i32
    %c0_i32_0 = arith.constant 0 : i32
    return %arg0, %c0_i32 : i32, i32
  }
  func.func @transform_1(%arg0: i32) -> (i32, i32) {
    %c0_i32 = arith.constant 0 : i32
    %c0_i32_0 = arith.constant 0 : i32
    return %arg0, %c0_i32 : i32, i32
  }
}

</mosaic_0001>

<llo_original>
// kernel: tpu_custom_call.1
$region0: #{tpu_custom_call.1}
  #allocation0 [shape = 'u32[]', space=smem, size = 0x4, offset = 0x4, fixed_abs, tag = 'smem constant byte address 0x4 - core index']
  #allocation1 [shape = 'u32[72,128]{1,0:T(1,128)}', space=vmem, size = 0x9000, scoped, tag = 'internal scratch']
  %s0 = inlined_call_operand.hbm [shape: f32[8,256], index: 0, kind: input, shape index: {}]
  %s1 = inlined_call_operand.hbm [shape: f32[8,256], index: 1, kind: output, shape index: {}]
  %s2 = sld [smem:[#allocation0]]
  $region18: #{tpu_custom_call.1} parent=0
    _
  %s4 = ssub.s32 1, %s2
  %s5 = scalar_select 0, %s4, %s2
  $region1: #{tpu_custom_call.1} parent=0
    #allocation2 [shape = 'u8[8192]{0}', space=vmem, size = 0x2000, scoped, tag = 'input window, operand 0, single buffered']
    #allocation3 [shape = 's32[1]{0}', space=sflag, size = 0x4, scoped, tag = 'scoped memory for tpu_custom_call.1']
    #allocation4 [shape = 's32[1]{0}', space=sflag, size = 0x4, scoped, tag = 'scoped memory for tpu_custom_call.1']
    #allocation5 [shape = 'u8[8192]{0}', space=vmem, size = 0x2000, scoped, tag = 'output window, operand 0, single buffered']
    %6 = vsyncpa [#allocation3], 0
    %7 = vsyncpa [#allocation4], 0
    // Predicated region
    $region2: #{tpu_custom_call.1} parent=1 // pred_check
      _
    $region3: #{tpu_custom_call.1} parent=1 // pred_check_branch
      %9 = sbr.rel (0) target = $region5
    $region4: #{tpu_custom_call.1} parent=1 // pred_region
      %11 = vsyncadd [#allocation3], 0
      %s13 = sshll.u32 %s0, 4
      %s14 = int_to_ptr.hbm [resolvable:$true] %s13
      %s15 = sshll.u32 [#allocation2], 4
      %s16 = int_to_ptr.vmem [resolvable:$true] %s15
      %18 = dma.hbm_to_vmem [thread:$0]  %s14, 256, %s16, [#allocation3]
    $region5: #{tpu_custom_call.1} parent=1 // pred_fallthru
      _
    // Predicated region
    $region6: #{tpu_custom_call.1} parent=1 // pred_check
      _
    $region7: #{tpu_custom_call.1} parent=1 // pred_check_branch
      %20 = sbr.rel (0) target = $region9
    $region8: #{tpu_custom_call.1} parent=1 // pred_region
      %22 = dma.done [#allocation3], 256
    $region9: #{tpu_custom_call.1} parent=1 // pred_fallthru
      _
    %v23 = vld [vmem:[#allocation2] sm:$0xff]
    %v24 = vld [vmem:[#allocation2 + $0x8] sm:$0xff]
    %25 = vst [vmem:[#allocation5] sm:$0xff] %v23
    %26 = vst [vmem:[#allocation5 + $0x8] sm:$0xff] %v24
    // Predicated region
    $region10: #{tpu_custom_call.1} parent=1 // pred_check
      _
    $region11: #{tpu_custom_call.1} parent=1 // pred_check_branch
      %28 = sbr.rel (0) target = $region13
    $region12: #{tpu_custom_call.1} parent=1 // pred_region
      %30 = vsyncadd [#allocation4], 0
      %s32 = sshll.u32 [#allocation5], 4
      %s33 = int_to_ptr.vmem [resolvable:$true] %s32
      %s34 = sshll.u32 %s1, 4
      %s35 = int_to_ptr.hbm [resolvable:$true] %s34
      %37 = dma.vmem_to_hbm [thread:$0]  %s33, 256, %s35, [#allocation4]
    $region13: #{tpu_custom_call.1} parent=1 // pred_fallthru
      _
    // Predicated region
    $region14: #{tpu_custom_call.1} parent=1 // pred_check
      _
    $region15: #{tpu_custom_call.1} parent=1 // pred_check_branch
      %39 = sbr.rel (0) target = $region17
    $region16: #{tpu_custom_call.1} parent=1 // pred_region
      %41 = dma.done [#allocation4], 256
    $region17: #{tpu_custom_call.1} parent=1 // pred_fallthru
      _
    %42 = vsyncpa [#allocation3], 1
    %43 = vsyncpa [#allocation4], 1

</llo_original>
